<compile_context>
chip_gen: v5e
topology: v5e:2x2
jax: 0.10.0
libtpu: 0.0.40
codegen_flags: <defaults>
</compile_context>

<pallas_src>
import functools

import jax
import jax.numpy as jnp
import numpy as np
from jax.experimental import pallas as pl
from jax.experimental.pallas import tpu as pltpu


def _round_up(x, m):
    return ((x + m - 1) // m) * m


def _features_linear_kernel(idx_ref, table_ref, bias_ref, out_ref, *, vocab_chunk):
    # idx_ref  : (F, TB)  int32 — combined (x + offsets) indices, batch on lanes
    # table_ref: (Dp, V)  f32   — whole transposed embedding table (VMEM-resident)
    # bias_ref : (Dp, 1)  f32
    # out_ref  : (Dp, TB) f32   — lane-dense output tile, batch on lanes
    F, TB = idx_ref.shape
    Dp, V = table_ref.shape

    idx = idx_ref[...]                                    # (F, TB) int32
    acc = jnp.zeros((Dp, TB), jnp.float32)

    # Vectorized gather-and-reduce over fields, chunked along the vocab so the
    # (chunk, TB) multi-hot intermediate stays small in VMEM/vregs.
    for c0 in range(0, V, vocab_chunk):                   # static unroll
        c = min(vocab_chunk, V - c0)
        vio = jax.lax.broadcasted_iota(jnp.int32, (c, TB), 0) + c0   # (c, TB)
        counts = jnp.zeros((c, TB), jnp.float32)
        for f in range(F):                                 # F is small & static
            counts = counts + jnp.where(idx[f:f + 1, :] == vio, 1.0, 0.0)
        # (Dp, c) @ (c, TB) on the MXU, f32 accumulate.
        acc = acc + jnp.dot(table_ref[:, c0:c0 + c], counts,
                            preferred_element_type=jnp.float32)

    # Bias added once per output tile; full-lane (unmasked) store.
    out_ref[...] = acc + bias_ref[...]


def features_linear(x, offsets, table, bias, *, batch_tile=512, vocab_chunk=1024):
    """x: (B, F) int; offsets: (F,) int; table: (V, D) f32; bias: (D,) f32.

    Returns (B, D) = sum_f table[x + offsets] + bias (same as the torch module).
    """
    B, F = x.shape
    V, D = table.shape

    # Fold per-field offsets into the indices (control data, plain JAX) and
    # lay the indices out with batch on the fast (lane) axis.
    idx = x.astype(jnp.int32) + offsets.reshape(1, F).astype(jnp.int32)   # (B, F)
    idxT = idx.T                                                          # (F, B)

    # Batch tile: lane axis -> multiple of 128, big enough to amortize per-step
    # overhead, clipped so tiny batches don't over-pad.
    TB = _round_up(min(batch_tile, _round_up(B, 128)), 128)
    Bp = _round_up(B, TB)
    if Bp != B:
        # Padded rows gather table row 0; they are sliced off below.
        idxT = jnp.pad(idxT, ((0, 0), (0, Bp - B)))

    # Pad output_dim up to a sublane multiple so every tile is (8,128)-friendly.
    Dp = _round_up(max(D, 1), 8)
    tableT = jnp.zeros((Dp, V), jnp.float32).at[:D, :].set(
        table.astype(jnp.float32).T)
    bias_p = jnp.zeros((Dp, 1), jnp.float32).at[:D, 0].set(
        bias.astype(jnp.float32))

    grid = (Bp // TB,)
    vc = int(min(vocab_chunk, V))
    kernel = functools.partial(_features_linear_kernel, vocab_chunk=vc)

    # Rough scoped-VMEM budget (double-buffer factors + chunk intermediates);
    # clamp to a range that is safe on v5e (16 MiB default) through v7x (64 MiB
    # physical) while still allowing a resident table of a few MiB.
    vmem_est = (2 * F * TB * 4 + 2 * Dp * V * 4 + 2 * Dp * TB * 4
                + 4 * vc * TB * 4 + (1 << 20))
    vmem_limit = int(min(max(vmem_est, 16 << 20), 32 << 20))

    cost = pl.CostEstimate(
        flops=int(2 * Bp * V * Dp + Bp * F * V),
        transcendentals=0,
        bytes_accessed=int(Bp * F * 4 + Dp * V * 4 + Dp * Bp * 4))

    out = pl.pallas_call(
        kernel,
        out_shape=jax.ShapeDtypeStruct((Dp, Bp), jnp.float32),
        grid_spec=pltpu.PrefetchScalarGridSpec(
            num_scalar_prefetch=0,
            grid=grid,
            in_specs=[
                # (F, TB) index tile for this batch tile (batch on lanes).
                pl.BlockSpec((F, TB), lambda i: (0, i)),
                # Whole (Dp, V) table, constant block index -> VMEM-resident.
                pl.BlockSpec((Dp, V), lambda i: (0, 0)),
                # Bias, constant.
                pl.BlockSpec((Dp, 1), lambda i: (0, 0)),
            ],
            out_specs=pl.BlockSpec((Dp, TB), lambda i: (0, i)),
        ),
        compiler_params=pltpu.CompilerParams(
            dimension_semantics=("parallel",),      # v7x: both TCs take tiles
            vmem_limit_bytes=vmem_limit),
        cost_estimate=cost,
    )(idxT, tableT, bias_p)

    return out[:D, :B].T


if __name__ == "__main__":
    # Small synthetic config consistent with the module's __init__ / forward.
    field_dims = (6, 5, 4, 3)          # sum(field_dims) = 18 embedding rows
    output_dim = 1
    batch = 8
    num_fields = len(field_dims)
    vocab = int(np.sum(field_dims))

    # offsets = (0, cumsum(field_dims)[:-1])
    offsets = jnp.asarray(
        np.array((0, *np.cumsum(field_dims)[:-1]), dtype=np.int32))

    key = jax.random.PRNGKey(0)
    k_tab, k_bias, k_x = jax.random.split(key, 3)

    # Embedding ~ N(0,1) like torch default; nonzero bias to exercise the add.
    table = jax.random.normal(k_tab, (vocab, output_dim), dtype=jnp.float32)
    bias = jax.random.normal(k_bias, (output_dim,), dtype=jnp.float32)

    # Per-field categorical indices in [0, field_dims[f]).
    cols = []
    for f, fd in enumerate(field_dims):
        cols.append(jax.random.randint(jax.random.fold_in(k_x, f),
                                       (batch, 1), 0, fd, dtype=jnp.int32))
    x = jnp.concatenate(cols, axis=1)   # (batch, num_fields) int32

    out = features_linear(x, offsets, table, bias)
    out = jax.block_until_ready(out)

    # Plain-JAX reference: sum over fields of table[x + offsets] + bias.
    ref = jnp.sum(jnp.take(table, x + offsets[None, :], axis=0), axis=1) + bias
    assert out.shape == (batch, output_dim)
    np.testing.assert_allclose(np.asarray(out), np.asarray(ref),
                               rtol=1e-6, atol=1e-5)

    print("KERNEL_OK")
</pallas_src>

<mosaic_0001>
module attributes {stable_mosaic.version = 11 : i64} {
  func.func @_features_linear_kernel(%arg0: i32, %arg1: memref<4x128xi32, #tpu.memory_space<vmem>>, %arg2: memref<8x18xf32, #tpu.memory_space<vmem>>, %arg3: memref<8x1xf32, #tpu.memory_space<vmem>>, %arg4: memref<8x128xf32, #tpu.memory_space<vmem>>) attributes {dimension_semantics = [#tpu.dimension_semantics<parallel>], iteration_bounds = array<i64: 1>, scalar_prefetch = 0 : i64, scratch_operands = 0 : i64, tpu.core_type = #tpu.core_type<tc>, window_params = [{transform_indices = @transform_0, window_bounds = array<i64: 4, 128>}, {pipeline_mode = #tpu.pipeline_mode<synchronous>, transform_indices = @transform_1, window_bounds = array<i64: 8, 18>}, {pipeline_mode = #tpu.pipeline_mode<synchronous>, transform_indices = @transform_2, window_bounds = array<i64: 8, 1>}, {transform_indices = @transform_3, window_bounds = array<i64: 8, 128>}]} {
    %c0 = arith.constant 0 : index
    %c0_0 = arith.constant 0 : index
    %0 = vector.load %arg1[%c0, %c0_0] : memref<4x128xi32, #tpu.memory_space<vmem>>, vector<4x128xi32>
    %cst = arith.constant 0.000000e+00 : f32
    %1 = vector.broadcast %cst : f32 to vector<8x128xf32>
    %2 = tpu.iota {dimensions = array<i32: 0>} : vector<18x128xi32>
    %c0_i32 = arith.constant 0 : i32
    %3 = vector.broadcast %c0_i32 : i32 to vector<18x128xi32>
    %4 = arith.addi %2, %3 : vector<18x128xi32>
    %cst_1 = arith.constant 0.000000e+00 : f32
    %5 = vector.broadcast %cst_1 : f32 to vector<18x128xf32>
    %6 = vector.extract_strided_slice %0 {offsets = [0, 0], sizes = [1, 128], strides = [1, 1]} : vector<4x128xi32> to vector<1x128xi32>
    %7 = vector.broadcast %6 : vector<1x128xi32> to vector<18x128xi32>
    %8 = arith.cmpi eq, %7, %4 : vector<18x128xi32>
    %cst_2 = arith.constant 1.000000e+00 : f32
    %cst_3 = arith.constant 0.000000e+00 : f32
    %9 = vector.broadcast %cst_2 : f32 to vector<18x128xf32>
    %10 = vector.broadcast %cst_3 : f32 to vector<18x128xf32>
    %11 = arith.select %8, %9, %10 : vector<18x128xi1>, vector<18x128xf32>
    %12 = arith.addf %5, %11 : vector<18x128xf32>
    %13 = vector.extract_strided_slice %0 {offsets = [1, 0], sizes = [1, 128], strides = [1, 1]} : vector<4x128xi32> to vector<1x128xi32>
    %14 = vector.broadcast %13 : vector<1x128xi32> to vector<18x128xi32>
    %15 = arith.cmpi eq, %14, %4 : vector<18x128xi32>
    %cst_4 = arith.constant 1.000000e+00 : f32
    %cst_5 = arith.constant 0.000000e+00 : f32
    %16 = vector.broadcast %cst_4 : f32 to vector<18x128xf32>
    %17 = vector.broadcast %cst_5 : f32 to vector<18x128xf32>
    %18 = arith.select %15, %16, %17 : vector<18x128xi1>, vector<18x128xf32>
    %19 = arith.addf %12, %18 : vector<18x128xf32>
    %20 = vector.extract_strided_slice %0 {offsets = [2, 0], sizes = [1, 128], strides = [1, 1]} : vector<4x128xi32> to vector<1x128xi32>
    %21 = vector.broadcast %20 : vector<1x128xi32> to vector<18x128xi32>
    %22 = arith.cmpi eq, %21, %4 : vector<18x128xi32>
    %cst_6 = arith.constant 1.000000e+00 : f32
    %cst_7 = arith.constant 0.000000e+00 : f32
    %23 = vector.broadcast %cst_6 : f32 to vector<18x128xf32>
    %24 = vector.broadcast %cst_7 : f32 to vector<18x128xf32>
    %25 = arith.select %22, %23, %24 : vector<18x128xi1>, vector<18x128xf32>
    %26 = arith.addf %19, %25 : vector<18x128xf32>
    %27 = vector.extract_strided_slice %0 {offsets = [3, 0], sizes = [1, 128], strides = [1, 1]} : vector<4x128xi32> to vector<1x128xi32>
    %28 = vector.broadcast %27 : vector<1x128xi32> to vector<18x128xi32>
    %29 = arith.cmpi eq, %28, %4 : vector<18x128xi32>
    %cst_8 = arith.constant 1.000000e+00 : f32
    %cst_9 = arith.constant 0.000000e+00 : f32
    %30 = vector.broadcast %cst_8 : f32 to vector<18x128xf32>
    %31 = vector.broadcast %cst_9 : f32 to vector<18x128xf32>
    %32 = arith.select %29, %30, %31 : vector<18x128xi1>, vector<18x128xf32>
    %33 = arith.addf %26, %32 : vector<18x128xf32>
    %c0_10 = arith.constant 0 : index
    %c0_11 = arith.constant 0 : index
    %34 = vector.load %arg2[%c0_10, %c0_11] : memref<8x18xf32, #tpu.memory_space<vmem>>, vector<8x18xf32>
    %cst_12 = arith.constant dense<0.000000e+00> : vector<8x128xf32>
    %35 = tpu.matmul %34, %33, %cst_12 {dimension_numbers = #tpu.dot_dimension_numbers<[1], [0], [0], [1], [0, 0, 1, 1], [], []>} : vector<8x18xf32>, vector<18x128xf32>, vector<8x128xf32> -> vector<8x128xf32>
    %36 = arith.addf %1, %35 : vector<8x128xf32>
    %c0_13 = arith.constant 0 : index
    %c0_14 = arith.constant 0 : index
    %37 = vector.load %arg3[%c0_13, %c0_14] : memref<8x1xf32, #tpu.memory_space<vmem>>, vector<8x1xf32>
    %38 = vector.broadcast %37 : vector<8x1xf32> to vector<8x128xf32>
    %39 = arith.addf %36, %38 : vector<8x128xf32>
    %c0_15 = arith.constant 0 : index
    %c0_16 = arith.constant 0 : index
    %40 = vector.load %arg4[%c0_15, %c0_16] : memref<8x128xf32, #tpu.memory_space<vmem>>, vector<8x128xf32>
    tpu.vector_store %arg4[%c0_15, %c0_16], %39 {strides = array<i32>} : memref<8x128xf32, #tpu.memory_space<vmem>>, vector<8x128xf32>,
    return
  }
  func.func @transform_0(%arg0: i32) -> (i32, i32) {
    %c0_i32 = arith.constant 0 : i32
    %c0_i32_0 = arith.constant 0 : i32
    return %c0_i32, %arg0 : i32, i32
  }
  func.func @transform_1(%arg0: i32) -> (i32, i32) {
    %c0_i32 = arith.constant 0 : i32
    %c0_i32_0 = arith.constant 0 : i32
    %c0_i32_1 = arith.constant 0 : i32
    return %c0_i32, %c0_i32_0 : i32, i32
  }
  func.func @transform_2(%arg0: i32) -> (i32, i32) {
    %c0_i32 = arith.constant 0 : i32
    %c0_i32_0 = arith.constant 0 : i32
    %c0_i32_1 = arith.constant 0 : i32
    return %c0_i32, %c0_i32_0 : i32, i32
  }
  func.func @transform_3(%arg0: i32) -> (i32, i32) {
    %c0_i32 = arith.constant 0 : i32
    %c0_i32_0 = arith.constant 0 : i32
    return %c0_i32, %arg0 : i32, i32
  }
}

</mosaic_0001>

<llo_original>
// kernel: tpu_custom_call.1
$region0: #{tpu_custom_call.1}
  #allocation0 [shape = 'u32[]', space=smem, size = 0x4, offset = 0x4, fixed_abs, tag = 'smem constant byte address 0x4 - core index']
  #allocation1 [shape = 'u32[72,128]{1,0:T(1,128)}', space=vmem, size = 0x9000, scoped, tag = 'internal scratch']
  %s0 = inlined_call_operand.hbm [shape: s32[4,128], index: 0, kind: input, shape index: {}]
  %s1 = inlined_call_operand.vmem [shape: f32[8,18], index: 1, kind: input, shape index: {}]
  %s2 = inlined_call_operand.vmem [shape: f32[8,1], index: 2, kind: input, shape index: {}]
  %s3 = inlined_call_operand.hbm [shape: f32[8,128], index: 3, kind: output, shape index: {}]
  %s4 = sld [smem:[#allocation0]]
  $region26: #{tpu_custom_call.1} parent=0
    _
  %s6 = ssub.s32 1, %s4
  %s7 = scalar_select 0, %s6, %s4
  $region1: #{tpu_custom_call.1} parent=0
    #allocation2 [shape = 'u8[2048]{0}', space=vmem, size = 0x800, scoped, tag = 'input window, operand 0, single buffered']
    #allocation3 [shape = 's32[1]{0}', space=sflag, size = 0x4, scoped, tag = 'scoped memory for tpu_custom_call.1']
    #allocation4 [shape = 's32[1]{0}', space=sflag, size = 0x4, scoped, tag = 'scoped memory for tpu_custom_call.1']
    #allocation5 [shape = 'u8[4096]{0}', space=vmem, size = 0x1000, scoped, tag = 'output window, operand 0, single buffered']
    %8 = vsyncpa [#allocation3], 0
    %9 = vsyncpa [#allocation4], 0
    // Predicated region
    $region2: #{tpu_custom_call.1} parent=1 // pred_check
      _
    $region3: #{tpu_custom_call.1} parent=1 // pred_check_branch
      %11 = sbr.rel (0) target = $region5
    $region4: #{tpu_custom_call.1} parent=1 // pred_region
      %13 = vsyncadd [#allocation3], 0
      %s15 = sshll.u32 %s0, 4
      %s16 = int_to_ptr.hbm [resolvable:$true] %s15
      %s17 = sshll.u32 [#allocation2], 4
      %s18 = int_to_ptr.vmem [resolvable:$true] %s17
      %20 = dma.hbm_to_vmem [thread:$0]  %s16, 64, %s18, [#allocation3]
    $region5: #{tpu_custom_call.1} parent=1 // pred_fallthru
      _
    // Predicated region
    $region6: #{tpu_custom_call.1} parent=1 // pred_check
      _
    $region7: #{tpu_custom_call.1} parent=1 // pred_check_branch
      %22 = sbr.rel (0) target = $region9
    $region8: #{tpu_custom_call.1} parent=1 // pred_region
      _
    $region9: #{tpu_custom_call.1} parent=1 // pred_fallthru
      _
    // Predicated region
    $region10: #{tpu_custom_call.1} parent=1 // pred_check
      _
    $region11: #{tpu_custom_call.1} parent=1 // pred_check_branch
      %24 = sbr.rel (0) target = $region13
    $region12: #{tpu_custom_call.1} parent=1 // pred_region
      _
    $region13: #{tpu_custom_call.1} parent=1 // pred_fallthru
      _
    // Predicated region
    $region14: #{tpu_custom_call.1} parent=1 // pred_check
      _
    $region15: #{tpu_custom_call.1} parent=1 // pred_check_branch
      %26 = sbr.rel (0) target = $region17
    $region16: #{tpu_custom_call.1} parent=1 // pred_region
      %28 = dma.done [#allocation3], 64
    $region17: #{tpu_custom_call.1} parent=1 // pred_fallthru
      _
    %v29 = vld [vmem:[#allocation2] sm:$0xf]
    %v30 = vlaneseq
    %v31 = vshrl.u32 %v30, 7
    %v32 = vadd.s32 %v31, 8
    %v33 = vadd.s32 %v31, 16
    %v34 = vperm.slane %v29, 0
    %vm35 = vcmp.eq.s32.totalorder %v34, %v31
    %vm36 = vcmp.eq.s32.totalorder %v34, %v32
    %vm37 = vcmp.eq.s32.totalorder %v34, %v33
    %v38 = vsel %vm35, 1.0, 0.0
    %v39 = vsel %vm36, 1.0, 0.0
    %v40 = vsel %vm37, 1.0, 0.0
    %v41 = vadd.f32 %v38, 0.0
    %v42 = vadd.f32 %v39, 0.0
    %v43 = vadd.f32 %v40, 0.0
    %v44 = vperm.slane %v29, 1
    %vm45 = vcmp.eq.s32.totalorder %v44, %v31
    %vm46 = vcmp.eq.s32.totalorder %v44, %v32
    %vm47 = vcmp.eq.s32.totalorder %v44, %v33
    %v48 = vsel %vm45, 1.0, 0.0
    %v49 = vsel %vm46, 1.0, 0.0
    %v50 = vsel %vm47, 1.0, 0.0
    %v51 = vadd.f32 %v41, %v48
    %v52 = vadd.f32 %v42, %v49
    %v53 = vadd.f32 %v43, %v50
    %v54 = vperm.slane %v29, 2
    %vm55 = vcmp.eq.s32.totalorder %v54, %v31
    %vm56 = vcmp.eq.s32.totalorder %v54, %v32
    %vm57 = vcmp.eq.s32.totalorder %v54, %v33
    %v58 = vsel %vm55, 1.0, 0.0
    %v59 = vsel %vm56, 1.0, 0.0
    %v60 = vsel %vm57, 1.0, 0.0
    %v61 = vadd.f32 %v51, %v58
    %v62 = vadd.f32 %v52, %v59
    %v63 = vadd.f32 %v53, %v60
    %v64 = vperm.slane %v29, 3
    %vm65 = vcmp.eq.s32.totalorder %v64, %v31
    %vm66 = vcmp.eq.s32.totalorder %v64, %v32
    %vm67 = vcmp.eq.s32.totalorder %v64, %v33
    %v68 = vsel %vm65, 1.0, 0.0
    %v69 = vsel %vm66, 1.0, 0.0
    %v70 = vsel %vm67, 1.0, 0.0
    %v71 = vadd.f32 %v61, %v68
    %v72 = vadd.f32 %v62, %v69
    %v73 = vadd.f32 %v63, %v70
    %v74 = vld [vmem:[%s1] sm:$0xff]
    %v75 = vld [vmem:[%s2] sm:$0xff]
    %77 = vset.pattern.permute.xlu0 0
    %78 = vperm.xlu0 %77, %v75
    %v79 = vpop.permute.xlu0 %78
    %vm81 = vcmask 146432
    %v83 = vsel %vm81, %v74, 0
    %vm85 = vcmask 1041408
    %v87 = vsel %vm85, %v73, 0
    %89 = vmatpush.msra.mxu0 0.0
    %90 = vmatpush.msra.mxu0 0.0
    %91 = vmatpush.msra.mxu0 0.0
    %92 = vmatpush.msra.mxu0 0.0
    %93 = vmatpush.msra.mxu0 0.0
    %94 = vmatpush.msra.mxu0 0.0
    %95 = vmatpush.msra.mxu0 0.0
    %96 = vmatpush.msra.mxu0 0.0
    %97 = vmatpush.msra.mxu0 0.0
    %98 = vmatpush.msra.mxu0 0.0
    %99 = vmatpush.msra.mxu0 0.0
    %100 = vmatpush.msra.mxu0 0.0
    %101 = vmatpush.msra.mxu0 0.0
    %102 = vmatpush.msra.mxu0 %v87
    %103 = vmatpush.msra.mxu0 %v72
    %104 = vmatpush.msra.mxu0 %v71
    %105 = vmatmul.f32.gmra.mxu0 %v83
    %v106 = vpop.f32.mrf.mxu0
    %v107 = vadd.f32 %v79, %v106
    %108 = vdwg.mxu0
    %109 = vst [vmem:[#allocation5] sm:$0xff] %v107
    // Predicated region
    $region18: #{tpu_custom_call.1} parent=1 // pred_check
      _
    $region19: #{tpu_custom_call.1} parent=1 // pred_check_branch
      %111 = sbr.rel (0) target = $region21
    $region20: #{tpu_custom_call.1} parent=1 // pred_region
      %113 = vsyncadd [#allocation4], 0
      %s115 = sshll.u32 [#allocation5], 4
      %s116 = int_to_ptr.vmem [resolvable:$true] %s115
      %s117 = sshll.u32 %s3, 4
      %s118 = int_to_ptr.hbm [resolvable:$true] %s117
      %120 = dma.vmem_to_hbm [thread:$0]  %s116, 128, %s118, [#allocation4]
    $region21: #{tpu_custom_call.1} parent=1 // pred_fallthru
      _
    // Predicated region
    $region22: #{tpu_custom_call.1} parent=1 // pred_check
      _
    $region23: #{tpu_custom_call.1} parent=1 // pred_check_branch
      %122 = sbr.rel (0) target = $region25
    $region24: #{tpu_custom_call.1} parent=1 // pred_region
      %124 = dma.done [#allocation4], 128
    $region25: #{tpu_custom_call.1} parent=1 // pred_fallthru
      _
    %125 = vsyncpa [#allocation3], 1
    %126 = vsyncpa [#allocation4], 1

</llo_original>
